<compile_context>
chip_gen: v5e
topology: v5e:2x2
jax: 0.10.0
libtpu: 0.0.40
codegen_flags: <defaults>
</compile_context>

<pallas_src>
import functools

import jax
import jax.numpy as jnp
from jax.experimental import pallas as pl
from jax.experimental.pallas import tpu as pltpu


# --------------------------------------------------------------------------- #
# Kernel
# --------------------------------------------------------------------------- #
def _actor_bcq_kernel(obs_ref, w1_ref, b1_ref, w2_ref, b2_ref, w3_ref, b3_ref,
                      out_ref, *, action_scale):
    x = obs_ref[...]                                             # (TB, D_obs)
    w1 = w1_ref[...]

    # FC1 + ReLU.  MXU matmul in the wider of the obs/weight dtypes (so a
    # caller-supplied bf16 obs keeps its HBM saving), f32 accumulation,
    # bias-add / relu in f32.
    dt1 = jnp.promote_types(x.dtype, w1.dtype)
    h1 = jnp.dot(x.astype(dt1), w1.astype(dt1),
                 preferred_element_type=jnp.float32)             # (TB, H)
    h1 = jnp.maximum(h1 + b1_ref[...].astype(jnp.float32), 0.0)

    # FC2 + ReLU (h1 is f32; weights are VMEM-resident, upcast is free).
    h2 = jnp.dot(h1, w2_ref[...].astype(jnp.float32),
                 preferred_element_type=jnp.float32)             # (TB, H)
    h2 = jnp.maximum(h2 + b2_ref[...].astype(jnp.float32), 0.0)

    # FC3 + tanh (EUP) + scale, all in f32; cast only at the store.
    h3 = jnp.dot(h2, w3_ref[...].astype(jnp.float32),
                 preferred_element_type=jnp.float32)             # (TB, D_act)
    out_ref[...] = (jnp.tanh(h3 + b3_ref[...].astype(jnp.float32))
                    * action_scale).astype(out_ref.dtype)


# --------------------------------------------------------------------------- #
# Wrapper helpers
# --------------------------------------------------------------------------- #
def _round_up(x, m):
    return ((x + m - 1) // m) * m


def _sublane_multiple(dtype):
    """Native sublane granularity for a dtype: 8 (f32), 16 (bf16), 32 (int8)."""
    itemsize = jnp.dtype(dtype).itemsize
    return max(8, 32 // max(itemsize, 1))


def _vmem_capacity_bytes():
    """Best-effort physical VMEM query; conservative (v7x-sized) fallback."""
    try:
        info = pltpu.get_tpu_info()
        cap = getattr(info, "vmem_capacity_bytes", None)
        if cap:
            return int(cap)
    except Exception:
        pass
    return 64 << 20  # assume the smallest (v7x) VMEM if we cannot tell


def cast_params_bf16(params):
    """Cast only the (tiny, one-time) weights to bf16; biases stay f32 so the
    f32 epilogue needs no extra converts."""
    out = dict(params)
    for k in ("w1", "w2", "w3"):
        out[k] = params[k].astype(jnp.bfloat16)
    return out


# --------------------------------------------------------------------------- #
# Forward pass
# --------------------------------------------------------------------------- #
def actor_bcq_forward(obs, params, action_scale, *, tile_b=None, out_dtype=None):
    """obs: (B, dim_observation), f32 or bf16 (caller's choice -- bf16 obs
    halves the dominant HBM read).  params: dict of W/b arrays stored as
    (in_features, out_features) / (1, out_features).  Returns (B, dim_action)
    in `out_dtype` (default f32)."""
    if not isinstance(action_scale, (int, float)):
        raise TypeError("action_scale must be a static Python scalar "
                        "(got a traced/array value).")

    w1, b1, w2, b2, w3, b3 = (params["w1"], params["b1"], params["w2"],
                              params["b2"], params["w3"], params["b3"])
    B, dim_obs = obs.shape
    hidden = w1.shape[1]
    dim_action = w3.shape[1]
    out_dtype = jnp.dtype(jnp.float32 if out_dtype is None else out_dtype)

    # --- chip-aware tile cap + VMEM budget ------------------------------------
    # Per-step VMEM footprint with lane padding is ~tb * 4 KiB (obs + out
    # double buffers plus f32 intermediates, all padded to 128 lanes).
    if _vmem_capacity_bytes() >= (100 << 20):      # v5e / v6e: 128 MiB VMEM
        chip_tile_cap, vmem_limit = 8192, 64 << 20
    else:                                          # v7x (64 MiB) or unknown
        chip_tile_cap, vmem_limit = 4096, 40 << 20

    # --- batch-tile selection --------------------------------------------------
    align = max(_sublane_multiple(obs.dtype), _sublane_multiple(out_dtype))
    tb = chip_tile_cap if tile_b is None else int(tile_b)
    if B <= align:
        tb = B                                     # full-extent block, no padding
    else:
        tb = max(align, _round_up(tb, align))
        tb = min(tb, _round_up(B, align))
        # >= 2 grid steps when possible so both v7x TensorCores get work.
        tb = min(tb, _round_up(pl.cdiv(B, 2), align))
    grid = (pl.cdiv(B, tb),)                       # ragged last block: Pallas masks

    kernel = functools.partial(_actor_bcq_kernel,
                               action_scale=float(action_scale))

    # obs / out tiles move with the grid; weights & biases use constant
    # index_maps so they are DMA'd once and stay VMEM-resident.
    const = lambda arr: pl.BlockSpec(arr.shape, lambda i: (0, 0))
    in_specs = [
        pl.BlockSpec((tb, dim_obs), lambda i: (i, 0)),   # obs
        const(w1), const(b1),
        const(w2), const(b2),
        const(w3), const(b3),
    ]
    out_specs = pl.BlockSpec((tb, dim_action), lambda i: (i, 0))

    param_bytes = sum(int(p.size) * jnp.dtype(p.dtype).itemsize
                      for p in (w1, b1, w2, b2, w3, b3))
    cost = pl.CostEstimate(
        flops=2 * B * (dim_obs * hidden + hidden * hidden + hidden * dim_action),
        transcendentals=B * dim_action,
        bytes_accessed=(int(obs.size) * jnp.dtype(obs.dtype).itemsize
                        + B * dim_action * out_dtype.itemsize
                        + param_bytes),
    )

    return pl.pallas_call(
        kernel,
        out_shape=jax.ShapeDtypeStruct((B, dim_action), out_dtype),
        grid=grid,
        in_specs=in_specs,
        out_specs=out_specs,
        compiler_params=pltpu.CompilerParams(
            dimension_semantics=("parallel",),     # megacore sharding on v7x
            vmem_limit_bytes=vmem_limit,
        ),
        cost_estimate=cost,
    )(obs, w1, b1, w2, b2, w3, b3)


# --------------------------------------------------------------------------- #
# Params / reference
# --------------------------------------------------------------------------- #
def init_params(key, dim_observation, dim_action):
    """Deterministic init matching the PyTorch Linear shapes (stored (in, out))."""
    ks = jax.random.split(key, 6)

    def unif(k, shape, fan_in):
        bound = 1.0 / jnp.sqrt(jnp.float32(fan_in))
        return jax.random.uniform(k, shape, jnp.float32, -bound, bound)

    return {
        "w1": unif(ks[0], (dim_observation, 10), dim_observation),
        "b1": unif(ks[1], (1, 10), dim_observation),
        "w2": unif(ks[2], (10, 10), 10),
        "b2": unif(ks[3], (1, 10), 10),
        "w3": unif(ks[4], (10, dim_action), 10),
        "b3": unif(ks[5], (1, dim_action), 10),
    }


def actor_bcq_reference(obs, params, action_scale):
    hp = jax.lax.Precision.HIGHEST
    h1 = jax.nn.relu(jnp.dot(obs, params["w1"], precision=hp) + params["b1"])
    h2 = jax.nn.relu(jnp.dot(h1, params["w2"], precision=hp) + params["b2"])
    return jnp.tanh(jnp.dot(h2, params["w3"], precision=hp) + params["b3"]) * action_scale


# --------------------------------------------------------------------------- #
# Demo / self-test
# --------------------------------------------------------------------------- #
if __name__ == "__main__":
    dim_observation = 32
    dim_action = 8
    action_scale = 2.0

    key = jax.random.PRNGKey(0)
    k_small, k_big, k_params = jax.random.split(key, 3)
    params = init_params(k_params, dim_observation, dim_action)

    # Case 1: tiny batch -> single full-extent block (no padding, no pl.cdiv
    # raggedness), f32 end to end.
    obs_small = jax.random.normal(k_small, (4, dim_observation), jnp.float32)
    ref_small = actor_bcq_reference(obs_small, params, action_scale)
    out_small = jax.block_until_ready(
        actor_bcq_forward(obs_small, params, action_scale))
    assert out_small.shape == (4, dim_action)
    assert jnp.allclose(out_small, ref_small, atol=1e-3, rtol=1e-3)

    # Case 2: ragged multi-step grid (2 blocks, last one partial -> masked
    # edge stores instead of a jnp.pad copy), f32.
    obs_big = jax.random.normal(k_big, (100, dim_observation), jnp.float32)
    ref_big = actor_bcq_reference(obs_big, params, action_scale)
    out_big = jax.block_until_ready(
        actor_bcq_forward(obs_big, params, action_scale))
    assert out_big.shape == (100, dim_action)
    assert jnp.allclose(out_big, ref_big, atol=1e-3, rtol=1e-3)

    # Case 3: caller-supplied bf16 obs (stands in for an upstream bf16
    # producer -- no wrapper-side cast, so the HBM read really is halved),
    # bf16 weights, bf16 output; f32 MXU accumulation and f32 epilogue.
    obs_bf16 = obs_big.astype(jnp.bfloat16)
    params_bf16 = cast_params_bf16(params)
    out_bf16 = jax.block_until_ready(
        actor_bcq_forward(obs_bf16, params_bf16, action_scale,
                          out_dtype=jnp.bfloat16))
    assert out_bf16.shape == (100, dim_action)
    assert out_bf16.dtype == jnp.bfloat16
    assert jnp.allclose(out_bf16.astype(jnp.float32), ref_big,
                        atol=5e-2, rtol=5e-2)

    print("KERNEL_OK")
</pallas_src>

<mosaic_0001>
module attributes {stable_mosaic.version = 11 : i64} {
  func.func @_actor_bcq_kernel(%arg0: i32, %arg1: memref<4x32xf32, #tpu.memory_space<vmem>>, %arg2: memref<32x10xf32, #tpu.memory_space<vmem>>, %arg3: memref<1x10xf32, #tpu.memory_space<vmem>>, %arg4: memref<10x10xf32, #tpu.memory_space<vmem>>, %arg5: memref<1x10xf32, #tpu.memory_space<vmem>>, %arg6: memref<10x8xf32, #tpu.memory_space<vmem>>, %arg7: memref<1x8xf32, #tpu.memory_space<vmem>>, %arg8: memref<4x8xf32, #tpu.memory_space<vmem>>) attributes {dimension_semantics = [#tpu.dimension_semantics<parallel>], iteration_bounds = array<i64: 1>, scalar_prefetch = 0 : i64, scratch_operands = 0 : i64, tpu.core_type = #tpu.core_type<tc>, window_params = [{transform_indices = @transform_0, window_bounds = array<i64: 4, 32>}, {pipeline_mode = #tpu.pipeline_mode<synchronous>, transform_indices = @transform_1, window_bounds = array<i64: 32, 10>}, {pipeline_mode = #tpu.pipeline_mode<synchronous>, transform_indices = @transform_2, window_bounds = array<i64: 1, 10>}, {pipeline_mode = #tpu.pipeline_mode<synchronous>, transform_indices = @transform_3, window_bounds = array<i64: 10, 10>}, {pipeline_mode = #tpu.pipeline_mode<synchronous>, transform_indices = @transform_4, window_bounds = array<i64: 1, 10>}, {pipeline_mode = #tpu.pipeline_mode<synchronous>, transform_indices = @transform_5, window_bounds = array<i64: 10, 8>}, {pipeline_mode = #tpu.pipeline_mode<synchronous>, transform_indices = @transform_6, window_bounds = array<i64: 1, 8>}, {transform_indices = @transform_7, window_bounds = array<i64: 4, 8>}]} {
    %c0 = arith.constant 0 : index
    %c0_0 = arith.constant 0 : index
    %0 = vector.load %arg1[%c0, %c0_0] : memref<4x32xf32, #tpu.memory_space<vmem>>, vector<4x32xf32>
    %c0_1 = arith.constant 0 : index
    %c0_2 = arith.constant 0 : index
    %1 = vector.load %arg2[%c0_1, %c0_2] : memref<32x10xf32, #tpu.memory_space<vmem>>, vector<32x10xf32>
    %cst = arith.constant dense<0.000000e+00> : vector<4x10xf32>
    %2 = tpu.matmul %0, %1, %cst {dimension_numbers = #tpu.dot_dimension_numbers<[1], [0], [0], [1], [0, 0, 1, 1], [], []>} : vector<4x32xf32>, vector<32x10xf32>, vector<4x10xf32> -> vector<4x10xf32>
    %c0_3 = arith.constant 0 : index
    %c0_4 = arith.constant 0 : index
    %3 = vector.load %arg3[%c0_3, %c0_4] : memref<1x10xf32, #tpu.memory_space<vmem>>, vector<1x10xf32>
    %4 = vector.broadcast %3 : vector<1x10xf32> to vector<4x10xf32>
    %5 = arith.addf %2, %4 : vector<4x10xf32>
    %cst_5 = arith.constant 0.000000e+00 : f32
    %6 = vector.broadcast %cst_5 : f32 to vector<4x10xf32>
    %7 = arith.maximumf %5, %6 : vector<4x10xf32>
    %c0_6 = arith.constant 0 : index
    %c0_7 = arith.constant 0 : index
    %8 = vector.load %arg4[%c0_6, %c0_7] : memref<10x10xf32, #tpu.memory_space<vmem>>, vector<10x10xf32>
    %cst_8 = arith.constant dense<0.000000e+00> : vector<4x10xf32>
    %9 = tpu.matmul %7, %8, %cst_8 {dimension_numbers = #tpu.dot_dimension_numbers<[1], [0], [0], [1], [0, 0, 1, 1], [], []>} : vector<4x10xf32>, vector<10x10xf32>, vector<4x10xf32> -> vector<4x10xf32>
    %c0_9 = arith.constant 0 : index
    %c0_10 = arith.constant 0 : index
    %10 = vector.load %arg5[%c0_9, %c0_10] : memref<1x10xf32, #tpu.memory_space<vmem>>, vector<1x10xf32>
    %11 = vector.broadcast %10 : vector<1x10xf32> to vector<4x10xf32>
    %12 = arith.addf %9, %11 : vector<4x10xf32>
    %cst_11 = arith.constant 0.000000e+00 : f32
    %13 = vector.broadcast %cst_11 : f32 to vector<4x10xf32>
    %14 = arith.maximumf %12, %13 : vector<4x10xf32>
    %c0_12 = arith.constant 0 : index
    %c0_13 = arith.constant 0 : index
    %15 = vector.load %arg6[%c0_12, %c0_13] : memref<10x8xf32, #tpu.memory_space<vmem>>, vector<10x8xf32>
    %cst_14 = arith.constant dense<0.000000e+00> : vector<4x8xf32>
    %16 = tpu.matmul %14, %15, %cst_14 {dimension_numbers = #tpu.dot_dimension_numbers<[1], [0], [0], [1], [0, 0, 1, 1], [], []>} : vector<4x10xf32>, vector<10x8xf32>, vector<4x8xf32> -> vector<4x8xf32>
    %c0_15 = arith.constant 0 : index
    %c0_16 = arith.constant 0 : index
    %17 = vector.load %arg7[%c0_15, %c0_16] : memref<1x8xf32, #tpu.memory_space<vmem>>, vector<1x8xf32>
    %18 = vector.broadcast %17 : vector<1x8xf32> to vector<4x8xf32>
    %19 = arith.addf %16, %18 : vector<4x8xf32>
    %20 = math.tanh %19 : vector<4x8xf32>
    %cst_17 = arith.constant 2.000000e+00 : f32
    %21 = vector.broadcast %cst_17 : f32 to vector<4x8xf32>
    %22 = arith.mulf %20, %21 : vector<4x8xf32>
    %c0_18 = arith.constant 0 : index
    %c0_19 = arith.constant 0 : index
    %23 = vector.load %arg8[%c0_18, %c0_19] : memref<4x8xf32, #tpu.memory_space<vmem>>, vector<4x8xf32>
    tpu.vector_store %arg8[%c0_18, %c0_19], %22 {strides = array<i32>} : memref<4x8xf32, #tpu.memory_space<vmem>>, vector<4x8xf32>,
    return
  }
  func.func @transform_0(%arg0: i32) -> (i32, i32) {
    %c0_i32 = arith.constant 0 : i32
    %c0_i32_0 = arith.constant 0 : i32
    return %arg0, %c0_i32 : i32, i32
  }
  func.func @transform_1(%arg0: i32) -> (i32, i32) {
    %c0_i32 = arith.constant 0 : i32
    %c0_i32_0 = arith.constant 0 : i32
    %c0_i32_1 = arith.constant 0 : i32
    return %c0_i32, %c0_i32_0 : i32, i32
  }
  func.func @transform_2(%arg0: i32) -> (i32, i32) {
    %c0_i32 = arith.constant 0 : i32
    %c0_i32_0 = arith.constant 0 : i32
    %c0_i32_1 = arith.constant 0 : i32
    return %c0_i32, %c0_i32_0 : i32, i32
  }
  func.func @transform_3(%arg0: i32) -> (i32, i32) {
    %c0_i32 = arith.constant 0 : i32
    %c0_i32_0 = arith.constant 0 : i32
    %c0_i32_1 = arith.constant 0 : i32
    return %c0_i32, %c0_i32_0 : i32, i32
  }
  func.func @transform_4(%arg0: i32) -> (i32, i32) {
    %c0_i32 = arith.constant 0 : i32
    %c0_i32_0 = arith.constant 0 : i32
    %c0_i32_1 = arith.constant 0 : i32
    return %c0_i32, %c0_i32_0 : i32, i32
  }
  func.func @transform_5(%arg0: i32) -> (i32, i32) {
    %c0_i32 = arith.constant 0 : i32
    %c0_i32_0 = arith.constant 0 : i32
    %c0_i32_1 = arith.constant 0 : i32
    return %c0_i32, %c0_i32_0 : i32, i32
  }
  func.func @transform_6(%arg0: i32) -> (i32, i32) {
    %c0_i32 = arith.constant 0 : i32
    %c0_i32_0 = arith.constant 0 : i32
    %c0_i32_1 = arith.constant 0 : i32
    return %c0_i32, %c0_i32_0 : i32, i32
  }
  func.func @transform_7(%arg0: i32) -> (i32, i32) {
    %c0_i32 = arith.constant 0 : i32
    %c0_i32_0 = arith.constant 0 : i32
    return %arg0, %c0_i32 : i32, i32
  }
}

</mosaic_0001>

<llo_original>
// kernel: tpu_custom_call.1
$region0: #{tpu_custom_call.1}
  #allocation0 [shape = 'u32[]', space=smem, size = 0x4, offset = 0x4, fixed_abs, tag = 'smem constant byte address 0x4 - core index']
  #allocation1 [shape = 'u32[72,128]{1,0:T(1,128)}', space=vmem, size = 0x9000, scoped, tag = 'internal scratch']
  %s0 = inlined_call_operand.vmem [shape: f32[4,32], index: 0, kind: input, shape index: {}]
  %s1 = inlined_call_operand.vmem [shape: f32[32,10], index: 1, kind: input, shape index: {}]
  %s2 = inlined_call_operand.vmem [shape: f32[1,10], index: 2, kind: input, shape index: {}]
  %s3 = inlined_call_operand.vmem [shape: f32[10,10], index: 3, kind: input, shape index: {}]
  %s4 = inlined_call_operand.vmem [shape: f32[1,10], index: 4, kind: input, shape index: {}]
  %s5 = inlined_call_operand.vmem [shape: f32[10,8], index: 5, kind: input, shape index: {}]
  %s6 = inlined_call_operand.vmem [shape: f32[1,8], index: 6, kind: input, shape index: {}]
  %s7 = inlined_call_operand.hbm [shape: f32[4,8], index: 7, kind: output, shape index: {}]
  %s8 = sld [smem:[#allocation0]]
  $region38: #{tpu_custom_call.1} parent=0
    _
  %s10 = ssub.s32 1, %s8
  %s11 = scalar_select 0, %s10, %s8
  $region1: #{tpu_custom_call.1} parent=0
    #allocation2 [shape = 'u8[2048]{0}', space=vmem, size = 0x800, scoped, tag = 'output window, operand 0, single buffered']
    #allocation3 [shape = 's32[1]{0}', space=sflag, size = 0x4, scoped, tag = 'scoped memory for tpu_custom_call.1']
    %12 = vsyncpa [#allocation3], 0
    // Predicated region
    $region2: #{tpu_custom_call.1} parent=1 // pred_check
      _
    $region3: #{tpu_custom_call.1} parent=1 // pred_check_branch
      %14 = sbr.rel (0) target = $region5
    $region4: #{tpu_custom_call.1} parent=1 // pred_region
      _
    $region5: #{tpu_custom_call.1} parent=1 // pred_fallthru
      _
    // Predicated region
    $region6: #{tpu_custom_call.1} parent=1 // pred_check
      _
    $region7: #{tpu_custom_call.1} parent=1 // pred_check_branch
      %16 = sbr.rel (0) target = $region9
    $region8: #{tpu_custom_call.1} parent=1 // pred_region
      _
    $region9: #{tpu_custom_call.1} parent=1 // pred_fallthru
      _
    // Predicated region
    $region10: #{tpu_custom_call.1} parent=1 // pred_check
      _
    $region11: #{tpu_custom_call.1} parent=1 // pred_check_branch
      %18 = sbr.rel (0) target = $region13
    $region12: #{tpu_custom_call.1} parent=1 // pred_region
      _
    $region13: #{tpu_custom_call.1} parent=1 // pred_fallthru
      _
    // Predicated region
    $region14: #{tpu_custom_call.1} parent=1 // pred_check
      _
    $region15: #{tpu_custom_call.1} parent=1 // pred_check_branch
      %20 = sbr.rel (0) target = $region17
    $region16: #{tpu_custom_call.1} parent=1 // pred_region
      _
    $region17: #{tpu_custom_call.1} parent=1 // pred_fallthru
      _
    // Predicated region
    $region18: #{tpu_custom_call.1} parent=1 // pred_check
      _
    $region19: #{tpu_custom_call.1} parent=1 // pred_check_branch
      %22 = sbr.rel (0) target = $region21
    $region20: #{tpu_custom_call.1} parent=1 // pred_region
      _
    $region21: #{tpu_custom_call.1} parent=1 // pred_fallthru
      _
    // Predicated region
    $region22: #{tpu_custom_call.1} parent=1 // pred_check
      _
    $region23: #{tpu_custom_call.1} parent=1 // pred_check_branch
      %24 = sbr.rel (0) target = $region25
    $region24: #{tpu_custom_call.1} parent=1 // pred_region
      _
    $region25: #{tpu_custom_call.1} parent=1 // pred_fallthru
      _
    // Predicated region
    $region26: #{tpu_custom_call.1} parent=1 // pred_check
      _
    $region27: #{tpu_custom_call.1} parent=1 // pred_check_branch
      %26 = sbr.rel (0) target = $region29
    $region28: #{tpu_custom_call.1} parent=1 // pred_region
      _
    $region29: #{tpu_custom_call.1} parent=1 // pred_fallthru
      _
    %v27 = vld [vmem:[%s0] sm:$0xf]
    %v28 = vld [vmem:[%s1] sm:$0xff]
    %v29 = vld [vmem:[%s1 + $0x8] sm:$0xff]
    %v30 = vld [vmem:[%s1 + $0x10] sm:$0xff]
    %v31 = vld [vmem:[%s1 + $0x18] sm:$0xff]
    %v32 = vld [vmem:[%s2] sm:$0x1]
    %v34 = vperm.slane %v32, 0
    %vm36 = vcmask 261120
    %v38 = vsel %vm36, %v27, 0
    %40 = vmatpush.msra.mxu0 0.0
    %41 = vmatpush.msra.mxu0 0.0
    %42 = vmatpush.msra.mxu0 0.0
    %43 = vmatpush.msra.mxu0 0.0
    %44 = vmatpush.msra.mxu0 0.0
    %45 = vmatpush.msra.mxu0 0.0
    %46 = vmatpush.msra.mxu0 0.0
    %47 = vmatpush.msra.mxu0 0.0
    %48 = vmatpush.msra.mxu0 0.0
    %49 = vmatpush.msra.mxu0 0.0
    %50 = vmatpush.msra.mxu0 0.0
    %51 = vmatpush.msra.mxu0 0.0
    %52 = vmatpush.msra.mxu0 %v31
    %53 = vmatpush.msra.mxu0 %v30
    %54 = vmatpush.msra.mxu0 %v29
    %55 = vmatpush.msra.mxu0 %v28
    %56 = vmatmul.f32.gmra.mxu0 %v38
    %v57 = vpop.f32.mrf.mxu0
    %v58 = vadd.f32 %v34, %v57
    %59 = vdwg.mxu0
    %v60 = vmax.f32 %v58, 0.0
    %v61 = vld [vmem:[%s3] sm:$0xff]
    %v62 = vld [vmem:[%s3 + $0x8] sm:$0x3]
    %v63 = vld [vmem:[%s4] sm:$0x1]
    %v65 = vperm.slane %v63, 0
    %vm67 = vcmask 80896
    %v69 = vsel %vm67, %v60, 0
    %vm71 = vcmask 1041408
    %v73 = vsel %vm71, %v62, 0
    %75 = vmatpush.msra.mxu0 0.0
    %76 = vmatpush.msra.mxu0 0.0
    %77 = vmatpush.msra.mxu0 0.0
    %78 = vmatpush.msra.mxu0 0.0
    %79 = vmatpush.msra.mxu0 0.0
    %80 = vmatpush.msra.mxu0 0.0
    %81 = vmatpush.msra.mxu0 0.0
    %82 = vmatpush.msra.mxu0 0.0
    %83 = vmatpush.msra.mxu0 0.0
    %84 = vmatpush.msra.mxu0 0.0
    %85 = vmatpush.msra.mxu0 0.0
    %86 = vmatpush.msra.mxu0 0.0
    %87 = vmatpush.msra.mxu0 0.0
    %88 = vmatpush.msra.mxu0 0.0
    %89 = vmatpush.msra.mxu0 %v73
    %90 = vmatpush.msra.mxu0 %v61
    %91 = vmatmul.f32.gmra.mxu0 %v69
    %v92 = vpop.f32.mrf.mxu0
    %v93 = vadd.f32 %v65, %v92
    %94 = vdwg.mxu0
    %v95 = vmax.f32 %v93, 0.0
    %v96 = vld [vmem:[%s5] sm:$0xff]
    %v97 = vld [vmem:[%s5 + $0x8] sm:$0x3]
    %v98 = vld [vmem:[%s6] sm:$0x1]
    %v100 = vperm.slane %v98, 0
    %v103 = vsel %vm67, %v95, 0
    %v106 = vsel %vm71, %v97, 0
    %108 = vmatpush.msra.mxu0 0.0
    %109 = vmatpush.msra.mxu0 0.0
    %110 = vmatpush.msra.mxu0 0.0
    %111 = vmatpush.msra.mxu0 0.0
    %112 = vmatpush.msra.mxu0 0.0
    %113 = vmatpush.msra.mxu0 0.0
    %114 = vmatpush.msra.mxu0 0.0
    %115 = vmatpush.msra.mxu0 0.0
    %116 = vmatpush.msra.mxu0 0.0
    %117 = vmatpush.msra.mxu0 0.0
    %118 = vmatpush.msra.mxu0 0.0
    %119 = vmatpush.msra.mxu0 0.0
    %120 = vmatpush.msra.mxu0 0.0
    %121 = vmatpush.msra.mxu0 0.0
    %122 = vmatpush.msra.mxu0 %v106
    %123 = vmatpush.msra.mxu0 %v96
    %124 = vmatmul.f32.gmra.mxu0 %v103
    %v125 = vpop.f32.mrf.mxu0
    %v126 = vadd.f32 %v100, %v125
    %127 = vdwg.mxu0
    %v128 = vtanh.pop %v126
    %v129 = vmul.f32 %v128, 2.0
    %vm130 = vcmask 60416
    %131 = vst.msk [vmem:[#allocation2] sm:$0xf] %vm130, %v129
    // Predicated region
    $region30: #{tpu_custom_call.1} parent=1 // pred_check
      _
    $region31: #{tpu_custom_call.1} parent=1 // pred_check_branch
      %133 = sbr.rel (0) target = $region33
    $region32: #{tpu_custom_call.1} parent=1 // pred_region
      %135 = vsyncadd [#allocation3], 0
      %s137 = sshll.u32 [#allocation2], 4
      %s138 = int_to_ptr.vmem [resolvable:$true] %s137
      %s139 = sshll.u32 %s7, 4
      %s140 = int_to_ptr.hbm [resolvable:$true] %s139
      %142 = dma.vmem_to_hbm [thread:$0]  %s138, 64, %s140, [#allocation3]
    $region33: #{tpu_custom_call.1} parent=1 // pred_fallthru
      _
    // Predicated region
    $region34: #{tpu_custom_call.1} parent=1 // pred_check
      _
    $region35: #{tpu_custom_call.1} parent=1 // pred_check_branch
      %144 = sbr.rel (0) target = $region37
    $region36: #{tpu_custom_call.1} parent=1 // pred_region
      %146 = dma.done [#allocation3], 64
    $region37: #{tpu_custom_call.1} parent=1 // pred_fallthru
      _
    %147 = vsyncpa [#allocation3], 1

</llo_original>
